<compile_context>
chip_gen: v5e
topology: v5e:2x2
jax: 0.10.0
libtpu: 0.0.40
codegen_flags: <defaults>
</compile_context>

<pallas_src>
import functools
import math

import numpy as np

import jax
import jax.numpy as jnp
from jax.experimental import pallas as pl
from jax.experimental.pallas import tpu as pltpu


def _bessel_kernel(freq_ref, d_ref, out_ref, *, norm_const, n_rows, use_recurrence):
    """freq_ref: SMEM (Rp,) f32 ; d_ref: (8, LT) f32 ; out_ref: (Rp, 8, LT) f32."""
    d = d_ref[...]                                # dense (8, LT) vregs
    # 1/d via EUP (approx) + one Newton step -> ~1-2 ulp of exact f32 division;
    # keeps the VALU free and overlaps with the sin/cos evaluation.
    inv = pl.reciprocal(d, approx=True)
    inv = inv * (2.0 - d * inv)
    scale = norm_const * inv                      # (8, LT)

    if use_recurrence:
        # Exact only because frequencies == pi*[1..R] (guarded in the wrapper):
        #   sin(k*pi*d):  s_{k+1} = 2*cos(pi*d)*s_k - s_{k-1},  s_0 = 0, s_1 = sin(pi*d)
        x = jnp.float32(math.pi) * d
        s_prev = jnp.zeros_like(d)
        s = jnp.sin(x)
        two_c = 2.0 * jnp.cos(x)
        out_ref[0] = scale * s                    # dense (8, LT) store
        for r in range(1, n_rows):
            s_prev, s = s, two_c * s - s_prev
            out_ref[r] = scale * s
    else:
        # General path (arbitrary / learned frequencies): one sin per row, still
        # on dense (8, LT) blocks with dense per-row stores.
        for r in range(n_rows):
            out_ref[r] = scale * jnp.sin(freq_ref[r] * d)


def spherical_bessel_basis(d_scaled, frequencies, cutoff, *,
                           chunk=32768, use_recurrence=None,
                           min_pallas_n=8192, return_transposed=False):
    """Pallas forward of SphericalBesselBasis.

    d_scaled: (N,) f32 scaled distances (>0); frequencies: (R,) f32.
    Returns (N, R) f32 (PyTorch convention), or the lane-dense (R, N) slab when
    return_transposed=True (preferred when a downstream [R, E] contraction can
    consume it / be fused, avoiding the extra transpose HBM round-trip).
    """
    d_scaled = jnp.asarray(d_scaled, jnp.float32)
    frequencies = jnp.asarray(frequencies, jnp.float32)
    N = d_scaled.shape[0]
    R = frequencies.shape[0]
    norm_const = math.sqrt(2.0 / cutoff ** 3)

    # Small problems: pallas_call dispatch + padding dominate; let XLA fuse.
    if N < min_pallas_n:
        basis = norm_const / d_scaled[:, None] * jnp.sin(
            frequencies[None, :] * d_scaled[:, None])
        return basis.T if return_transposed else basis

    # Use the Chebyshev recurrence only when frequencies are verifiably the
    # canonical pi*[1..R] (guards learned/arbitrary frequencies).
    if use_recurrence is None:
        use_recurrence = False
        try:
            f_np = np.asarray(frequencies, dtype=np.float32)
            expect = (np.pi * np.arange(1, R + 1)).astype(np.float32)
            use_recurrence = bool(np.allclose(f_np, expect, rtol=1e-6, atol=0.0))
        except Exception:
            use_recurrence = False  # traced values: cannot inspect, stay general

    SUB, LANE = 8, 128
    min_chunk = SUB * LANE                         # 1024 d-elements
    Rp = pl.cdiv(R, SUB) * SUB                     # sublane-aligned output rows

    # Chunk = d-elements per grid step (~1 MiB of output per step for R=8),
    # rebalanced across the grid so tail padding stays small.
    chunk = max(min_chunk, (int(chunk) // min_chunk) * min_chunk)
    Np0 = pl.cdiv(N, min_chunk) * min_chunk
    chunk = min(chunk, Np0)
    grid = pl.cdiv(Np0, chunk)
    chunk = pl.cdiv(pl.cdiv(Np0, grid), min_chunk) * min_chunk
    Np = grid * chunk
    LT = chunk // SUB                              # lane-tile, multiple of 128
    Srows = Np // LT                               # multiple of 8

    if Np != N:                                    # padded d=1.0 -> finite garbage, sliced off
        d_scaled = jnp.pad(d_scaled, (0, Np - N), constant_values=1.0)
    d2 = d_scaled.reshape(Srows, LT)               # free reshape: dense (8, LT) blocks

    if Rp != R:
        frequencies = jnp.pad(frequencies, (0, Rp - R), constant_values=1.0)

    kernel = functools.partial(_bessel_kernel, norm_const=norm_const,
                               n_rows=Rp, use_recurrence=use_recurrence)

    out = pl.pallas_call(
        kernel,
        out_shape=jax.ShapeDtypeStruct((Rp, Srows, LT), jnp.float32),
        grid_spec=pltpu.PrefetchScalarGridSpec(
            num_scalar_prefetch=1,                 # frequencies -> SMEM scalars
            grid=(grid,),
            in_specs=[pl.BlockSpec((SUB, LT), lambda i, f: (i, 0))],
            out_specs=pl.BlockSpec((Rp, SUB, LT), lambda i, f: (0, i, 0)),
        ),
        compiler_params=pltpu.CompilerParams(
            # TODO(synk): on v7x verify in the trace that the tile axis shards
            # across both TensorCores; if not, switch to pltpu.CORE_PARALLEL.
            dimension_semantics=("parallel",),
            vmem_limit_bytes=32 * 1024 * 1024,
        ),
    )(frequencies, d2)

    out = out.reshape(Rp, Np)[:R, :N]              # (R, N) lane-dense slab
    if return_transposed:
        return out
    # PyTorch (N, R) convention. TODO(synk): if this basis feeds an [R, E]
    # contraction, fuse that matmul into the kernel instead of transposing.
    return out.T


if __name__ == "__main__":
    num_radial = 8
    cutoff = 5.0
    N = 200   # deliberately not a multiple of 8*128 to exercise the padded tail

    # Deterministic parameter init, exactly as the PyTorch __init__:
    # frequencies = pi * [1, 2, ..., num_radial]
    frequencies = jnp.asarray(np.pi * np.arange(1, num_radial + 1), dtype=jnp.float32)

    key = jax.random.PRNGKey(0)
    # scaled distances in (0, 1]; keep away from 0 to avoid division by zero
    d_scaled = jax.random.uniform(key, (N,), dtype=jnp.float32,
                                  minval=0.05, maxval=1.0)

    norm_const = math.sqrt(2.0 / cutoff ** 3)
    ref = norm_const / d_scaled[:, None] * jnp.sin(frequencies * d_scaled[:, None])

    # 1) Pallas path forced (min_pallas_n=0), Chebyshev recurrence auto-detected.
    out = spherical_bessel_basis(d_scaled, frequencies, cutoff, min_pallas_n=0)
    out = jax.block_until_ready(out)
    assert out.shape == (N, num_radial)
    assert jnp.allclose(out, ref, atol=1e-5, rtol=1e-5)

    # 2) General-frequency (per-row sin) path, lane-dense transposed output.
    out_t = spherical_bessel_basis(d_scaled, frequencies, cutoff, min_pallas_n=0,
                                   use_recurrence=False, return_transposed=True)
    out_t = jax.block_until_ready(out_t)
    assert out_t.shape == (num_radial, N)
    assert jnp.allclose(out_t.T, ref, atol=1e-5, rtol=1e-5)

    # 3) Small-N plain-jnp fallback (default threshold) matches too.
    out_fb = jax.block_until_ready(spherical_bessel_basis(d_scaled, frequencies, cutoff))
    assert jnp.allclose(out_fb, ref, atol=1e-5, rtol=1e-5)

    print("KERNEL_OK")
</pallas_src>

<mosaic_0001>
module attributes {stable_mosaic.version = 11 : i64} {
  func.func @_bessel_kernel(%arg0: i32, %arg1: memref<8xf32, #tpu.memory_space<smem>>, %arg2: memref<8x128xf32, #tpu.memory_space<vmem>>, %arg3: memref<8x8x128xf32, #tpu.memory_space<vmem>>) attributes {dimension_semantics = [#tpu.dimension_semantics<parallel>], iteration_bounds = array<i64: 1>, scalar_prefetch = 1 : i64, scratch_operands = 0 : i64, tpu.core_type = #tpu.core_type<tc>, window_params = [{transform_indices = @transform_0, window_bounds = array<i64: 8, 128>}, {transform_indices = @transform_1, window_bounds = array<i64: 8, 8, 128>}]} {
    %c0 = arith.constant 0 : index
    %c0_0 = arith.constant 0 : index
    %0 = vector.load %arg2[%c0, %c0_0] : memref<8x128xf32, #tpu.memory_space<vmem>>, vector<8x128xf32>
    %1 = tpu.reciprocal %0 {approx = true} : vector<8x128xf32> -> vector<8x128xf32>
    %2 = arith.mulf %0, %1 : vector<8x128xf32>
    %cst = arith.constant 2.000000e+00 : f32
    %3 = vector.broadcast %cst : f32 to vector<8x128xf32>
    %4 = arith.subf %3, %2 : vector<8x128xf32>
    %5 = arith.mulf %1, %4 : vector<8x128xf32>
    %cst_1 = arith.constant 0.1264911 : f32
    %6 = vector.broadcast %cst_1 : f32 to vector<8x128xf32>
    %7 = arith.mulf %6, %5 : vector<8x128xf32>
    %cst_2 = arith.constant 3.14159274 : f32
    %8 = vector.broadcast %cst_2 : f32 to vector<8x128xf32>
    %9 = arith.mulf %8, %0 : vector<8x128xf32>
    %cst_3 = arith.constant 0.000000e+00 : f32
    %10 = vector.broadcast %cst_3 : f32 to vector<8x128xf32>
    %11 = math.sin %9 : vector<8x128xf32>
    %12 = math.cos %9 : vector<8x128xf32>
    %cst_4 = arith.constant 2.000000e+00 : f32
    %13 = vector.broadcast %cst_4 : f32 to vector<8x128xf32>
    %14 = arith.mulf %13, %12 : vector<8x128xf32>
    %15 = arith.mulf %7, %11 : vector<8x128xf32>
    %c0_5 = arith.constant 0 : index
    %c0_6 = arith.constant 0 : index
    %c0_7 = arith.constant 0 : index
    %16 = vector.load %arg3[%c0_5, %c0_6, %c0_7] : memref<8x8x128xf32, #tpu.memory_space<vmem>>, vector<1x8x128xf32>
    %17 = vector.shape_cast %16 : vector<1x8x128xf32> to vector<8x128xf32>
    %18 = vector.shape_cast %15 : vector<8x128xf32> to vector<1x8x128xf32>
    tpu.vector_store %arg3[%c0_5, %c0_6, %c0_7], %18 {strides = array<i32>} : memref<8x8x128xf32, #tpu.memory_space<vmem>>, vector<1x8x128xf32>,
    %19 = arith.mulf %14, %11 : vector<8x128xf32>
    %20 = arith.subf %19, %10 : vector<8x128xf32>
    %21 = arith.mulf %7, %20 : vector<8x128xf32>
    %c1 = arith.constant 1 : index
    %c0_8 = arith.constant 0 : index
    %c0_9 = arith.constant 0 : index
    %22 = vector.load %arg3[%c1, %c0_8, %c0_9] : memref<8x8x128xf32, #tpu.memory_space<vmem>>, vector<1x8x128xf32>
    %23 = vector.shape_cast %22 : vector<1x8x128xf32> to vector<8x128xf32>
    %24 = vector.shape_cast %21 : vector<8x128xf32> to vector<1x8x128xf32>
    tpu.vector_store %arg3[%c1, %c0_8, %c0_9], %24 {strides = array<i32>} : memref<8x8x128xf32, #tpu.memory_space<vmem>>, vector<1x8x128xf32>,
    %25 = arith.mulf %14, %20 : vector<8x128xf32>
    %26 = arith.subf %25, %11 : vector<8x128xf32>
    %27 = arith.mulf %7, %26 : vector<8x128xf32>
    %c2 = arith.constant 2 : index
    %c0_10 = arith.constant 0 : index
    %c0_11 = arith.constant 0 : index
    %28 = vector.load %arg3[%c2, %c0_10, %c0_11] : memref<8x8x128xf32, #tpu.memory_space<vmem>>, vector<1x8x128xf32>
    %29 = vector.shape_cast %28 : vector<1x8x128xf32> to vector<8x128xf32>
    %30 = vector.shape_cast %27 : vector<8x128xf32> to vector<1x8x128xf32>
    tpu.vector_store %arg3[%c2, %c0_10, %c0_11], %30 {strides = array<i32>} : memref<8x8x128xf32, #tpu.memory_space<vmem>>, vector<1x8x128xf32>,
    %31 = arith.mulf %14, %26 : vector<8x128xf32>
    %32 = arith.subf %31, %20 : vector<8x128xf32>
    %33 = arith.mulf %7, %32 : vector<8x128xf32>
    %c3 = arith.constant 3 : index
    %c0_12 = arith.constant 0 : index
    %c0_13 = arith.constant 0 : index
    %34 = vector.load %arg3[%c3, %c0_12, %c0_13] : memref<8x8x128xf32, #tpu.memory_space<vmem>>, vector<1x8x128xf32>
    %35 = vector.shape_cast %34 : vector<1x8x128xf32> to vector<8x128xf32>
    %36 = vector.shape_cast %33 : vector<8x128xf32> to vector<1x8x128xf32>
    tpu.vector_store %arg3[%c3, %c0_12, %c0_13], %36 {strides = array<i32>} : memref<8x8x128xf32, #tpu.memory_space<vmem>>, vector<1x8x128xf32>,
    %37 = arith.mulf %14, %32 : vector<8x128xf32>
    %38 = arith.subf %37, %26 : vector<8x128xf32>
    %39 = arith.mulf %7, %38 : vector<8x128xf32>
    %c4 = arith.constant 4 : index
    %c0_14 = arith.constant 0 : index
    %c0_15 = arith.constant 0 : index
    %40 = vector.load %arg3[%c4, %c0_14, %c0_15] : memref<8x8x128xf32, #tpu.memory_space<vmem>>, vector<1x8x128xf32>
    %41 = vector.shape_cast %40 : vector<1x8x128xf32> to vector<8x128xf32>
    %42 = vector.shape_cast %39 : vector<8x128xf32> to vector<1x8x128xf32>
    tpu.vector_store %arg3[%c4, %c0_14, %c0_15], %42 {strides = array<i32>} : memref<8x8x128xf32, #tpu.memory_space<vmem>>, vector<1x8x128xf32>,
    %43 = arith.mulf %14, %38 : vector<8x128xf32>
    %44 = arith.subf %43, %32 : vector<8x128xf32>
    %45 = arith.mulf %7, %44 : vector<8x128xf32>
    %c5 = arith.constant 5 : index
    %c0_16 = arith.constant 0 : index
    %c0_17 = arith.constant 0 : index
    %46 = vector.load %arg3[%c5, %c0_16, %c0_17] : memref<8x8x128xf32, #tpu.memory_space<vmem>>, vector<1x8x128xf32>
    %47 = vector.shape_cast %46 : vector<1x8x128xf32> to vector<8x128xf32>
    %48 = vector.shape_cast %45 : vector<8x128xf32> to vector<1x8x128xf32>
    tpu.vector_store %arg3[%c5, %c0_16, %c0_17], %48 {strides = array<i32>} : memref<8x8x128xf32, #tpu.memory_space<vmem>>, vector<1x8x128xf32>,
    %49 = arith.mulf %14, %44 : vector<8x128xf32>
    %50 = arith.subf %49, %38 : vector<8x128xf32>
    %51 = arith.mulf %7, %50 : vector<8x128xf32>
    %c6 = arith.constant 6 : index
    %c0_18 = arith.constant 0 : index
    %c0_19 = arith.constant 0 : index
    %52 = vector.load %arg3[%c6, %c0_18, %c0_19] : memref<8x8x128xf32, #tpu.memory_space<vmem>>, vector<1x8x128xf32>
    %53 = vector.shape_cast %52 : vector<1x8x128xf32> to vector<8x128xf32>
    %54 = vector.shape_cast %51 : vector<8x128xf32> to vector<1x8x128xf32>
    tpu.vector_store %arg3[%c6, %c0_18, %c0_19], %54 {strides = array<i32>} : memref<8x8x128xf32, #tpu.memory_space<vmem>>, vector<1x8x128xf32>,
    %55 = arith.mulf %14, %50 : vector<8x128xf32>
    %56 = arith.subf %55, %44 : vector<8x128xf32>
    %57 = arith.mulf %7, %56 : vector<8x128xf32>
    %c7 = arith.constant 7 : index
    %c0_20 = arith.constant 0 : index
    %c0_21 = arith.constant 0 : index
    %58 = vector.load %arg3[%c7, %c0_20, %c0_21] : memref<8x8x128xf32, #tpu.memory_space<vmem>>, vector<1x8x128xf32>
    %59 = vector.shape_cast %58 : vector<1x8x128xf32> to vector<8x128xf32>
    %60 = vector.shape_cast %57 : vector<8x128xf32> to vector<1x8x128xf32>
    tpu.vector_store %arg3[%c7, %c0_20, %c0_21], %60 {strides = array<i32>} : memref<8x8x128xf32, #tpu.memory_space<vmem>>, vector<1x8x128xf32>,
    return
  }
  func.func @transform_0(%arg0: i32, %arg1: memref<8xf32, #tpu.memory_space<smem>>) -> (i32, i32) {
    %c0_i32 = arith.constant 0 : i32
    %c0_i32_0 = arith.constant 0 : i32
    return %arg0, %c0_i32 : i32, i32
  }
  func.func @transform_1(%arg0: i32, %arg1: memref<8xf32, #tpu.memory_space<smem>>) -> (i32, i32, i32) {
    %c0_i32 = arith.constant 0 : i32
    %c0_i32_0 = arith.constant 0 : i32
    %c0_i32_1 = arith.constant 0 : i32
    return %c0_i32, %arg0, %c0_i32_0 : i32, i32, i32
  }
}

</mosaic_0001>

<llo_original>
// kernel: tpu_custom_call.1
$region0: #{tpu_custom_call.1}
  #allocation0 [shape = 'u32[]', space=smem, size = 0x4, offset = 0x4, fixed_abs, tag = 'smem constant byte address 0x4 - core index']
  #allocation1 [shape = 'u32[72,128]{1,0:T(1,128)}', space=vmem, size = 0x9000, scoped, tag = 'internal scratch']
  #allocation2 [shape = 's32[1]{0}', space=sflag, size = 0x4, scoped, tag = 'scoped memory for tpu_custom_call.1']
  #allocation3 [shape = 'u8[512]{0}', space=smem, size = 0x200, scoped, tag = 'prefetched SMEM operand 0']
  %s0 = inlined_call_operand.hbm [shape: f32[8], index: 0, kind: input, shape index: {}]
  %s1 = inlined_call_operand.hbm [shape: f32[8,128], index: 1, kind: input, shape index: {}]
  %s2 = inlined_call_operand.hbm [shape: f32[8,8,128], index: 2, kind: output, shape index: {}]
  %s3 = sld [smem:[#allocation0]]
  $region18: #{tpu_custom_call.1} parent=0
    _
  %s5 = ssub.s32 1, %s3
  %s6 = scalar_select 0, %s5, %s3
  %s8 = sshll.u32 %s0, 4
  %s9 = int_to_ptr.hbm [resolvable:$true] %s8
  %11 = dma.hbm_to_smem %s9, 16, [#allocation3], [#allocation2]
  %13 = dma.done [#allocation2], 16
  %14 = sfence
  $region1: #{tpu_custom_call.1} parent=0
    #allocation4 [shape = 'u8[4096]{0}', space=vmem, size = 0x1000, scoped, tag = 'input window, operand 1, single buffered']
    #allocation5 [shape = 's32[1]{0}', space=sflag, size = 0x4, scoped, tag = 'scoped memory for tpu_custom_call.1']
    #allocation6 [shape = 's32[1]{0}', space=sflag, size = 0x4, scoped, tag = 'scoped memory for tpu_custom_call.1']
    #allocation7 [shape = 'u8[32768]{0}', space=vmem, size = 0x8000, scoped, tag = 'output window, operand 0, single buffered']
    %15 = vsyncpa [#allocation5], 0
    %16 = vsyncpa [#allocation6], 0
    // Predicated region
    $region2: #{tpu_custom_call.1} parent=1 // pred_check
      _
    $region3: #{tpu_custom_call.1} parent=1 // pred_check_branch
      %18 = sbr.rel (0) target = $region5
    $region4: #{tpu_custom_call.1} parent=1 // pred_region
      %20 = vsyncadd [#allocation5], 0
      %s22 = sshll.u32 %s1, 4
      %s23 = int_to_ptr.hbm [resolvable:$true] %s22
      %s24 = sshll.u32 [#allocation4], 4
      %s25 = int_to_ptr.vmem [resolvable:$true] %s24
      %27 = dma.hbm_to_vmem [thread:$0]  %s23, 128, %s25, [#allocation5]
    $region5: #{tpu_custom_call.1} parent=1 // pred_fallthru
      _
    // Predicated region
    $region6: #{tpu_custom_call.1} parent=1 // pred_check
      _
    $region7: #{tpu_custom_call.1} parent=1 // pred_check_branch
      %29 = sbr.rel (0) target = $region9
    $region8: #{tpu_custom_call.1} parent=1 // pred_region
      %31 = dma.done [#allocation5], 128
    $region9: #{tpu_custom_call.1} parent=1 // pred_fallthru
      _
    %v32 = vld [vmem:[#allocation4] sm:$0xff]
    %v33 = vrcp.pop %v32
    %v34 = vmul.f32 %v32, %v33
    %v35 = vsub.f32 2.0, %v34
    %v36 = vmul.f32 %v33, %v35
    %v37 = vmul.f32 %v36, 0.1264911
    %v38 = vmul.f32 %v32, 3.1415927
    %v39 = vand.u32 2147483647, %v38
    %vm40 = vcmp.le.f32.partialorder %v39, 0.7853982
    %vm41 = vcmp.lt.s32.totalorder %v38, 0
    %v42 = vand.u32 %v38, 2139095040
    %v43 = vshrl.u32 %v42, 23
    %v44 = vsub.s32 %v43, 127
    %v45 = vand.u32 2147483647, %v38
    %v46 = vand.u32 %v45, 8388607
    %v47 = vor.u32 %v46, 8388608
    %v48 = vsub.s32 0, %v47
    %v49 = vadd.s32 %v44, 1
    %vm50 = vcmp.gt.s32.totalorder %v49, 0
    %v51 = vsel %vm50, %v49, 0
    %v52 = vshrl.u32 %v51, 5
    %v53 = vand.u32 %v51, 31
    %v54 = vsub.s32 32, %v53
    %v55 = vshrl.u32 683565275, %v54
    %v56 = vshll.u32 683565275, %v53
    %v57 = vshrl.u32 2475754826, %v54
    %v58 = vor.u32 %v56, %v57
    %v59 = vshll.u32 2475754826, %v53
    %v60 = vshrl.u32 2131351028, %v54
    %v61 = vor.u32 %v59, %v60
    %v62 = vshll.u32 2131351028, %v53
    %v63 = vshrl.u32 2102212464, %v54
    %v64 = vor.u32 %v62, %v63
    %v65 = vshll.u32 2102212464, %v53
    %v66 = vshrl.u32 920167782, %v54
    %v67 = vor.u32 %v65, %v66
    %v68 = vshll.u32 920167782, %v53
    %v69 = vshrl.u32 1326507024, %v54
    %v70 = vor.u32 %v68, %v69
    %vm71 = vcmp.lt.s32.totalorder %v52, 1
    %vm72 = vcmp.lt.s32.totalorder %v52, 2
    %vm73 = vcmp.lt.s32.totalorder %v52, 3
    %vm74 = vcmp.lt.s32.totalorder %v52, 4
    %v75 = vsel %vm71, %v55, %v58
    %v76 = vsel %vm74, %v64, 2102212464
    %v77 = vsel %vm73, %v61, %v76
    %v78 = vsel %vm72, %v75, %v77
    %v79 = vsel %vm71, %v58, %v61
    %v80 = vsel %vm74, %v67, 920167782
    %v81 = vsel %vm73, %v64, %v80
    %v82 = vsel %vm72, %v79, %v81
    %v83 = vsel %vm71, %v61, %v64
    %v84 = vsel %vm74, %v70, 1326507024
    %v85 = vsel %vm73, %v67, %v84
    %v86 = vsel %vm72, %v83, %v85
    %v87 = vshll.u32 %v47, 8
    %v88 = vand.u32 %v87, 65535
    %v89 = vshrl.u32 %v87, 16
    %v90 = vand.u32 %v86, 65535
    %v91 = vshrl.u32 %v86, 16
    %v92 = vmul.u32 %v88, %v90
    %v93 = vmul.u32 %v88, %v91
    %v94 = vmul.u32 %v89, %v90
    %v95 = vmul.u32 %v89, %v91
    %v96 = vshll.u32 %v93, 16
    %v97 = vshrl.u32 %v93, 16
    %v98 = vshll.u32 %v94, 16
    %v99 = vshrl.u32 %v94, 16
    %vm100 = vc.u32 %v92, %v96
    %v101 = vsel %vm100, 1, 0
    %v102 = vadd.s32 %v92, %v96
    %v103 = vadd.s32 %v95, %v101
    %vm104 = vc.u32 %v102, %v98
    %v105 = vsel %vm104, 1, 0
    %v106 = vadd.s32 %v102, %v98
    %v107 = vadd.s32 %v103, %v105
    %v108 = vadd.s32 %v107, %v97
    %v109 = vadd.s32 %v108, %v99
    %v110 = vand.u32 %v87, 65535
    %v111 = vshrl.u32 %v87, 16
    %v112 = vand.u32 %v82, 65535
    %v113 = vshrl.u32 %v82, 16
    %v114 = vmul.u32 %v110, %v112
    %v115 = vmul.u32 %v110, %v113
    %v116 = vmul.u32 %v111, %v112
    %v117 = vmul.u32 %v111, %v113
    %v118 = vshll.u32 %v115, 16
    %v119 = vshrl.u32 %v115, 16
    %v120 = vshll.u32 %v116, 16
    %v121 = vshrl.u32 %v116, 16
    %vm122 = vc.u32 %v114, %v118
    %v123 = vsel %vm122, 1, 0
    %v124 = vadd.s32 %v114, %v118
    %v125 = vadd.s32 %v117, %v123
    %vm126 = vc.u32 %v124, %v120
    %v127 = vsel %vm126, 1, 0
    %v128 = vadd.s32 %v124, %v120
    %v129 = vadd.s32 %v125, %v127
    %v130 = vadd.s32 %v129, %v119
    %v131 = vadd.s32 %v130, %v121
    %v132 = vmul.u32 %v87, %v78
    %v133 = vadd.s32 %v109, %v128
    %vm134 = vc.u32 %v109, %v128
    %v135 = vadd.s32 %v131, 1
    %v136 = vsel %vm134, %v135, %v131
    %v137 = vadd.s32 %v132, %v136
    %v138 = vadd.s32 %v137, 536870912
    %v139 = vshrl.u32 %v138, 30
    %v140 = vshll.u32 %v139, 30
    %v141 = vsub.s32 %v137, %v140
    %vm142 = vcmp.lt.s32.totalorder %v141, 0
    %v143 = vsub.s32 0, %v141
    %v144 = vsel %vm142, %v143, %v141
    %v145 = vclz %v144
    %v146 = vsub.s32 %v145, 2
    %vm147 = vcmp.gt.s32.totalorder 0, %v146
    %v148 = vsel %vm147, 0, %v146
    %v149 = vsub.s32 32, %v148
    %v150 = vshll.u32 %v141, %v148
    %v151 = vshrl.u32 %v133, %v149
    %v152 = vor.u32 %v150, %v151
    %v153 = vsub.s32 4294967266, %v148
    %v154 = vadd.s32 %v153, 127
    %v155 = vshll.u32 %v154, 23
    %v156 = vor.u32 4788187, %v155
    %v157 = vand.u32 2147483647, %v156
    %v159 = vcvt.s32.f32 %v152
    %v160 = vmul.f32 %v159, %v157
    %v161 = vxor.u32 %v160, 2147483648
    %v162 = vsel %vm41, %v161, %v160
    %v163 = vsub.s32 4, %v139
    %v164 = vsel %vm41, %v163, %v139
    %v165 = vsel %vm40, %v38, %v162
    %v166 = vsel %vm40, 0, %v164
    %v167 = vmul.f32 %v165, %v165
    %v168 = vmul.f32 %v167, -0.001358992
    %v169 = vadd.f32 %v168, 0.041655596
    %v170 = vmul.f32 %v167, %v169
    %v171 = vadd.f32 %v170, -0.4999988
    %v172 = vmul.f32 %v167, %v171
    %v173 = vadd.f32 1.0, %v172
    %v174 = vmul.f32 %v165, %v165
    %v175 = vmul.f32 %v174, -0.00019511016
    %v176 = vadd.f32 %v175, 0.008332121
    %v177 = vmul.f32 %v174, %v176
    %v178 = vadd.f32 %v177, -0.16666654
    %v179 = vmul.f32 %v174, %v178
    %v180 = vadd.f32 %v179, 1.0
    %v181 = vmul.f32 %v180, %v165
    %vm182 = vweird.f32 %v38
    %v183 = vadd.s32 %v166, 3
    %v184 = vand.u32 %v183, 3
    %vm185 = vcmp.lt.s32.totalorder %v184, 2
    %vm186 = vcmp.eq.s32.totalorder %v184, 0
    %v187 = vxor.u32 %v181, 2147483648
    %v188 = vsel %vm186, %v173, %v187
    %vm189 = vcmp.eq.s32.totalorder %v184, 2
    %v190 = vxor.u32 %v173, 2147483648
    %v191 = vsel %vm189, %v190, %v181
    %v192 = vsel %vm185, %v188, %v191
    %v193 = vsel %vm182, nan, %v192
    %v194 = vand.u32 2147483647, %v38
    %vm195 = vcmp.le.f32.partialorder %v194, 0.7853982
    %vm196 = vcmp.lt.s32.totalorder %v38, 0
    %v197 = vand.u32 %v38, 2139095040
    %v198 = vshrl.u32 %v197, 23
    %v199 = vsub.s32 %v198, 127
    %v200 = vand.u32 2147483647, %v38
    %v201 = vand.u32 %v200, 8388607
    %v202 = vor.u32 %v201, 8388608
    %v203 = vsub.s32 0, %v202
    %v204 = vadd.s32 %v199, 1
    %vm205 = vcmp.gt.s32.totalorder %v204, 0
    %v206 = vsel %vm205, %v204, 0
    %v207 = vshrl.u32 %v206, 5
    %v208 = vand.u32 %v206, 31
    %v209 = vsub.s32 32, %v208
    %v210 = vshrl.u32 683565275, %v209
    %v211 = vshll.u32 683565275, %v208
    %v212 = vshrl.u32 2475754826, %v209
    %v213 = vor.u32 %v211, %v212
    %v214 = vshll.u32 2475754826, %v208
    %v215 = vshrl.u32 2131351028, %v209
    %v216 = vor.u32 %v214, %v215
    %v217 = vshll.u32 2131351028, %v208
    %v218 = vshrl.u32 2102212464, %v209
    %v219 = vor.u32 %v217, %v218
    %v220 = vshll.u32 2102212464, %v208
    %v221 = vshrl.u32 920167782, %v209
    %v222 = vor.u32 %v220, %v221
    %v223 = vshll.u32 920167782, %v208
    %v224 = vshrl.u32 1326507024, %v209
    %v225 = vor.u32 %v223, %v224
    %vm226 = vcmp.lt.s32.totalorder %v207, 1
    %vm227 = vcmp.lt.s32.totalorder %v207, 2
    %vm228 = vcmp.lt.s32.totalorder %v207, 3
    %vm229 = vcmp.lt.s32.totalorder %v207, 4
    %v230 = vsel %vm226, %v210, %v213
    %v231 = vsel %vm229, %v219, 2102212464
    %v232 = vsel %vm228, %v216, %v231
    %v233 = vsel %vm227, %v230, %v232
    %v234 = vsel %vm226, %v213, %v216
    %v235 = vsel %vm229, %v222, 920167782
    %v236 = vsel %vm228, %v219, %v235
    %v237 = vsel %vm227, %v234, %v236
    %v238 = vsel %vm226, %v216, %v219
    %v239 = vsel %vm229, %v225, 1326507024
    %v240 = vsel %vm228, %v222, %v239
    %v241 = vsel %vm227, %v238, %v240
    %v242 = vshll.u32 %v202, 8
    %v243 = vand.u32 %v242, 65535
    %v244 = vshrl.u32 %v242, 16
    %v245 = vand.u32 %v241, 65535
    %v246 = vshrl.u32 %v241, 16
    %v247 = vmul.u32 %v243, %v245
    %v248 = vmul.u32 %v243, %v246
    %v249 = vmul.u32 %v244, %v245
    %v250 = vmul.u32 %v244, %v246
    %v251 = vshll.u32 %v248, 16
    %v252 = vshrl.u32 %v248, 16
    %v253 = vshll.u32 %v249, 16
    %v254 = vshrl.u32 %v249, 16
    %vm255 = vc.u32 %v247, %v251
    %v256 = vsel %vm255, 1, 0
    %v257 = vadd.s32 %v247, %v251
    %v258 = vadd.s32 %v250, %v256
    %vm259 = vc.u32 %v257, %v253
    %v260 = vsel %vm259, 1, 0
    %v261 = vadd.s32 %v257, %v253
    %v262 = vadd.s32 %v258, %v260
    %v263 = vadd.s32 %v262, %v252
    %v264 = vadd.s32 %v263, %v254
    %v265 = vand.u32 %v242, 65535
    %v266 = vshrl.u32 %v242, 16
    %v267 = vand.u32 %v237, 65535
    %v268 = vshrl.u32 %v237, 16
    %v269 = vmul.u32 %v265, %v267
    %v270 = vmul.u32 %v265, %v268
    %v271 = vmul.u32 %v266, %v267
    %v272 = vmul.u32 %v266, %v268
    %v273 = vshll.u32 %v270, 16
    %v274 = vshrl.u32 %v270, 16
    %v275 = vshll.u32 %v271, 16
    %v276 = vshrl.u32 %v271, 16
    %vm277 = vc.u32 %v269, %v273
    %v278 = vsel %vm277, 1, 0
    %v279 = vadd.s32 %v269, %v273
    %v280 = vadd.s32 %v272, %v278
    %vm281 = vc.u32 %v279, %v275
    %v282 = vsel %vm281, 1, 0
    %v283 = vadd.s32 %v279, %v275
    %v284 = vadd.s32 %v280, %v282
    %v285 = vadd.s32 %v284, %v274
    %v286 = vadd.s32 %v285, %v276
    %v287 = vmul.u32 %v242, %v233
    %v288 = vadd.s32 %v264, %v283
    %vm289 = vc.u32 %v264, %v283
    %v290 = vadd.s32 %v286, 1
    %v291 = vsel %vm289, %v290, %v286
    %v292 = vadd.s32 %v287, %v291
    %v293 = vadd.s32 %v292, 536870912
    %v294 = vshrl.u32 %v293, 30
    %v295 = vshll.u32 %v294, 30
    %v296 = vsub.s32 %v292, %v295
    %vm297 = vcmp.lt.s32.totalorder %v296, 0
    %v298 = vsub.s32 0, %v296
    %v299 = vsel %vm297, %v298, %v296
    %v300 = vclz %v299
    %v301 = vsub.s32 %v300, 2
    %vm302 = vcmp.gt.s32.totalorder 0, %v301
    %v303 = vsel %vm302, 0, %v301
    %v304 = vsub.s32 32, %v303
    %v305 = vshll.u32 %v296, %v303
    %v306 = vshrl.u32 %v288, %v304
    %v307 = vor.u32 %v305, %v306
    %v308 = vsub.s32 4294967266, %v303
    %v309 = vadd.s32 %v308, 127
    %v310 = vshll.u32 %v309, 23
    %v311 = vor.u32 4788187, %v310
    %v312 = vand.u32 2147483647, %v311
    %v314 = vcvt.s32.f32 %v307
    %v315 = vmul.f32 %v314, %v312
    %v316 = vxor.u32 %v315, 2147483648
    %v317 = vsel %vm196, %v316, %v315
    %v318 = vsub.s32 4, %v294
    %v319 = vsel %vm196, %v318, %v294
    %v320 = vsel %vm195, %v38, %v317
    %v321 = vsel %vm195, 0, %v319
    %v322 = vmul.f32 %v320, %v320
    %v323 = vmul.f32 %v322, -0.001358992
    %v324 = vadd.f32 %v323, 0.041655596
    %v325 = vmul.f32 %v322, %v324
    %v326 = vadd.f32 %v325, -0.4999988
    %v327 = vmul.f32 %v322, %v326
    %v328 = vadd.f32 1.0, %v327
    %v329 = vmul.f32 %v320, %v320
    %v330 = vmul.f32 %v329, -0.00019511016
    %v331 = vadd.f32 %v330, 0.008332121
    %v332 = vmul.f32 %v329, %v331
    %v333 = vadd.f32 %v332, -0.16666654
    %v334 = vmul.f32 %v329, %v333
    %v335 = vadd.f32 %v334, 1.0
    %v336 = vmul.f32 %v335, %v320
    %vm337 = vweird.f32 %v38
    %v338 = vand.u32 %v321, 3
    %vm339 = vcmp.lt.s32.totalorder %v338, 2
    %vm340 = vcmp.eq.s32.totalorder %v338, 0
    %v341 = vxor.u32 %v336, 2147483648
    %v342 = vsel %vm340, %v328, %v341
    %vm343 = vcmp.eq.s32.totalorder %v338, 2
    %v344 = vxor.u32 %v328, 2147483648
    %v345 = vsel %vm343, %v344, %v336
    %v346 = vsel %vm339, %v342, %v345
    %v347 = vsel %vm337, nan, %v346
    %v348 = vmul.f32 %v347, 2.0
    %v349 = vmul.f32 %v37, %v193
    %350 = vst [vmem:[#allocation7] sm:$0xff] %v349
    %v351 = vmul.f32 %v348, %v193
    %v352 = vmul.f32 %v37, %v351
    %s353 = scalar_lea.vmem [#allocation7], 8
    %354 = vst [vmem:[%s353] sm:$0xff] %v352
    %v355 = vmul.f32 %v348, %v351
    %v356 = vsub.f32 %v355, %v193
    %v357 = vmul.f32 %v37, %v356
    %s358 = scalar_lea.vmem [#allocation7], 16
    %359 = vst [vmem:[%s358] sm:$0xff] %v357
    %v360 = vmul.f32 %v348, %v356
    %v361 = vsub.f32 %v360, %v351
    %v362 = vmul.f32 %v37, %v361
    %s363 = scalar_lea.vmem [#allocation7], 24
    %364 = vst [vmem:[%s363] sm:$0xff] %v362
    %v365 = vmul.f32 %v348, %v361
    %v366 = vsub.f32 %v365, %v356
    %v367 = vmul.f32 %v37, %v366
    %s368 = scalar_lea.vmem [#allocation7], 32
    %369 = vst [vmem:[%s368] sm:$0xff] %v367
    %v370 = vmul.f32 %v348, %v366
    %v371 = vsub.f32 %v370, %v361
    %v372 = vmul.f32 %v37, %v371
    %s373 = scalar_lea.vmem [#allocation7], 40
    %374 = vst [vmem:[%s373] sm:$0xff] %v372
    %v375 = vmul.f32 %v348, %v371
    %v376 = vsub.f32 %v375, %v366
    %v377 = vmul.f32 %v37, %v376
    %s378 = scalar_lea.vmem [#allocation7], 48
    %379 = vst [vmem:[%s378] sm:$0xff] %v377
    %v380 = vmul.f32 %v348, %v376
    %v381 = vsub.f32 %v380, %v371
    %v382 = vmul.f32 %v37, %v381
    %s383 = scalar_lea.vmem [#allocation7], 56
    %384 = vst [vmem:[%s383] sm:$0xff] %v382
    // Predicated region
    $region10: #{tpu_custom_call.1} parent=1 // pred_check
      _
    $region11: #{tpu_custom_call.1} parent=1 // pred_check_branch
      %386 = sbr.rel (0) target = $region13
    $region12: #{tpu_custom_call.1} parent=1 // pred_region
      %388 = vsyncadd [#allocation6], 0
      %s389 = sshll.u32 [#allocation7], 4
      %s390 = int_to_ptr.vmem [resolvable:$true] %s389
      %s391 = sshll.u32 %s2, 4
      %s392 = int_to_ptr.hbm [resolvable:$true] %s391
      %397 = dma.vmem_to_hbm [thread:$0]  %s390, 1024, %s392, [#allocation6], 128, 128, 8
    $region13: #{tpu_custom_call.1} parent=1 // pred_fallthru
      _
    // Predicated region
    $region14: #{tpu_custom_call.1} parent=1 // pred_check
      _
    $region15: #{tpu_custom_call.1} parent=1 // pred_check_branch
      %399 = sbr.rel (0) target = $region17
    $region16: #{tpu_custom_call.1} parent=1 // pred_region
      %401 = dma.done [#allocation6], 1024
    $region17: #{tpu_custom_call.1} parent=1 // pred_fallthru
      _
    %402 = vsyncpa [#allocation5], 1
    %403 = vsyncpa [#allocation6], 1

</llo_original>
